<compile_context>
chip_gen: v7x
topology: tpu7x:2x2x1
jax: 0.10.0
libtpu: 0.0.40
codegen_flags: <defaults>
</compile_context>

<pallas_src>
import functools

import jax
import jax.numpy as jnp
from jax import lax
from jax.experimental import pallas as pl
from jax.experimental.pallas import tpu as pltpu

_HEAD_ROWS = 8  # f32 sublane tile; only row 0 of the output head weights is real.


def _ceil_to(x, m):
    return -(-x // m) * m


def _single_q_kernel(obs_ref, act_ref, w1o_ref, w1a_ref, b1_ref,
                     w2_ref, b2_ref, w3_ref, b3_ref, out_ref, *,
                     use_tanh, q_scale):
    """One batch tile of the full Q MLP (hidden_depth=2), fused."""
    # Layer 1: x @ W1 + b1 with x = [obs ‖ action], done as two dots (no concat).
    h = jnp.dot(obs_ref[...], w1o_ref[...], preferred_element_type=jnp.float32)
    h = h + jnp.dot(act_ref[...], w1a_ref[...], preferred_element_type=jnp.float32)
    h = jnp.maximum(h + b1_ref[...], 0.0)                       # [tile_b, H]
    # Layer 2.
    h = jnp.dot(h, w2_ref[...], preferred_element_type=jnp.float32)
    h = jnp.maximum(h + b2_ref[...], 0.0)                       # [tile_b, H]
    # Output head with batch on the LANE axis (contract last-with-last):
    #   q8[i, b] = sum_k w3[i, k] * h[b, k]; only row 0 of w3 is real.
    q8 = lax.dot_general(w3_ref[...], h, (((1,), (1,)), ((), ())),
                         preferred_element_type=jnp.float32)     # [8, tile_b]
    q = q8[0:1, :] + b3_ref[...]                                 # [1, tile_b]
    if use_tanh:
        q = jnp.tanh(q) * q_scale
    out_ref[...] = q.reshape(out_ref.shape).astype(out_ref.dtype)


def single_q_critic_forward(obs, action, params, *, use_tanh=True, gamma=0.99,
                            batch_tile=2048):
    """obs: [B, obs_dim] (or [B, obs_dim, 1]); action: [B, action_dim].

    params (see _make_params), all float32:
      w1_obs [obs_dim, H], w1_act [action_dim, H], b1 [1, H],
      w2 [H, H], b2 [1, H],
      w3 [8, H] (row 0 = output weights, rows 1..7 zero), b3 [1, 1].
    Returns q: [B, 1] float32.
    """
    if obs.ndim == 3 and obs.shape[-1] == 1:     # mirrors torch `obs.squeeze(-1)`
        obs = obs[..., 0]
    assert obs.shape[0] == action.shape[0]
    B = obs.shape[0]
    obs = obs.astype(jnp.float32)
    action = action.astype(jnp.float32)

    w1o, w1a = params["w1_obs"], params["w1_act"]
    b1, w2, b2, w3, b3 = (params["b1"], params["w2"], params["b2"],
                          params["w3"], params["b3"])
    obs_dim, _ = w1o.shape
    act_dim = w1a.shape[0]
    assert obs.shape[1] == obs_dim and action.shape[1] == act_dim

    # Batch tiling: a single tile for small batches (f32 sublane tile = 8);
    # for large batches a lane-dense multiple-of-128 tile, capped at
    # `batch_tile`, with >= 2 grid steps so v7x's two TensorCores both work.
    if B <= 256:
        tile_b = _ceil_to(max(B, 8), 8)
        b_pad = tile_b
    else:
        tile_b = min(batch_tile, _ceil_to(-(-B // 2), 128))
        b_pad = _ceil_to(B, tile_b)

    if b_pad != B:
        obs = jnp.pad(obs, ((0, b_pad - B), (0, 0)))
        action = jnp.pad(action, ((0, b_pad - B), (0, 0)))
    num_tiles = b_pad // tile_b

    kernel = functools.partial(_single_q_kernel, use_tanh=use_tanh,
                               q_scale=1.0 / (1.0 - gamma))

    def full_spec(arr):  # weights/biases: constant full block -> VMEM-resident
        return pl.BlockSpec(arr.shape, lambda i: (0,) * arr.ndim)

    out = pl.pallas_call(
        kernel,
        out_shape=jax.ShapeDtypeStruct((num_tiles, 1, tile_b), jnp.float32),
        grid=(num_tiles,),
        in_specs=[
            pl.BlockSpec((tile_b, obs_dim), lambda i: (i, 0)),
            pl.BlockSpec((tile_b, act_dim), lambda i: (i, 0)),
            full_spec(w1o), full_spec(w1a), full_spec(b1),
            full_spec(w2), full_spec(b2), full_spec(w3), full_spec(b3),
        ],
        out_specs=pl.BlockSpec((1, 1, tile_b), lambda i: (i, 0, 0)),
        compiler_params=pltpu.CompilerParams(
            dimension_semantics=("parallel",)),
    )(obs, action, w1o, w1a, b1, w2, b2, w3, b3)

    return out.reshape(b_pad)[:B].reshape(B, 1)


def _make_params(key, obs_dim, action_dim, hidden_dim):
    """Orthogonal weights (orthogonal_init_), zero biases; hidden_depth = 2.

    PyTorch Linear stores W as [out, in] and computes x @ W.T; we store W.T
    ([in, out]) so the kernel does x @ W. W1 is split into obs / action rows
    (no concat in the kernel); the output head is stored as an [8, H] row block
    (row 0 real) so the final dot has a sublane-aligned left operand.
    """
    ortho = jax.nn.initializers.orthogonal()
    ks = jax.random.split(key, 3)
    in_dim = obs_dim + action_dim

    w1 = jnp.transpose(ortho(ks[0], (hidden_dim, in_dim), jnp.float32))      # [in, H]
    w2 = jnp.transpose(ortho(ks[1], (hidden_dim, hidden_dim), jnp.float32))  # [H, H]
    w3_row = ortho(ks[2], (1, hidden_dim), jnp.float32)                      # [1, H] == torch W3
    return {
        "w1_obs": w1[:obs_dim],
        "w1_act": w1[obs_dim:],
        "b1": jnp.zeros((1, hidden_dim), jnp.float32),
        "w2": w2,
        "b2": jnp.zeros((1, hidden_dim), jnp.float32),
        "w3": jnp.pad(w3_row, ((0, _HEAD_ROWS - 1), (0, 0))),                # [8, H]
        "b3": jnp.zeros((1, 1), jnp.float32),
    }


def _reference_forward(obs, action, params, *, use_tanh=True, gamma=0.99):
    """Pure-JAX reference mirroring the kernel's math (f32 throughout)."""
    if obs.ndim == 3 and obs.shape[-1] == 1:
        obs = obs[..., 0]
    h = (obs.astype(jnp.float32) @ params["w1_obs"]
         + action.astype(jnp.float32) @ params["w1_act"] + params["b1"])
    h = jnp.maximum(h, 0.0)
    h = jnp.maximum(h @ params["w2"] + params["b2"], 0.0)
    q = h @ params["w3"][0:1, :].T + params["b3"]
    if use_tanh:
        q = jnp.tanh(q) * (1.0 / (1.0 - gamma))
    return q


if __name__ == "__main__":
    # Small shapes: batch=8, obs_dim=16, action_dim=4, hidden_dim=32, hidden_depth=2.
    B, OBS_DIM, ACT_DIM, HIDDEN = 8, 16, 4, 32
    GAMMA = 0.99

    key = jax.random.PRNGKey(0)
    k_obs, k_act, k_params = jax.random.split(key, 3)

    obs = jax.random.normal(k_obs, (B, OBS_DIM), dtype=jnp.float32)
    action = jax.random.normal(k_act, (B, ACT_DIM), dtype=jnp.float32)
    params = _make_params(k_params, OBS_DIM, ACT_DIM, HIDDEN)

    out = single_q_critic_forward(obs, action, params, use_tanh=True, gamma=GAMMA)
    out = jax.block_until_ready(out)

    ref = _reference_forward(obs, action, params, use_tanh=True, gamma=GAMMA)
    assert out.shape == (B, 1), out.shape
    assert jnp.allclose(out, ref, atol=1e-2, rtol=1e-2), (out, ref)

    print("KERNEL_OK")
</pallas_src>

<mosaic_0001>
module attributes {stable_mosaic.version = 11 : i64} {
  func.func @_single_q_kernel(%arg0: i32, %arg1: memref<8x16xf32, #tpu.memory_space<vmem>>, %arg2: memref<8x4xf32, #tpu.memory_space<vmem>>, %arg3: memref<16x32xf32, #tpu.memory_space<vmem>>, %arg4: memref<4x32xf32, #tpu.memory_space<vmem>>, %arg5: memref<1x32xf32, #tpu.memory_space<vmem>>, %arg6: memref<32x32xf32, #tpu.memory_space<vmem>>, %arg7: memref<1x32xf32, #tpu.memory_space<vmem>>, %arg8: memref<8x32xf32, #tpu.memory_space<vmem>>, %arg9: memref<1x1xf32, #tpu.memory_space<vmem>>, %arg10: memref<1x1x8xf32, #tpu.memory_space<vmem>>) attributes {dimension_semantics = [#tpu.dimension_semantics<parallel>], iteration_bounds = array<i64: 1>, scalar_prefetch = 0 : i64, scratch_operands = 0 : i64, tpu.core_type = #tpu.core_type<tc>, window_params = [{transform_indices = @transform_0, window_bounds = array<i64: 8, 16>}, {transform_indices = @transform_1, window_bounds = array<i64: 8, 4>}, {pipeline_mode = #tpu.pipeline_mode<synchronous>, transform_indices = @transform_2, window_bounds = array<i64: 16, 32>}, {pipeline_mode = #tpu.pipeline_mode<synchronous>, transform_indices = @transform_3, window_bounds = array<i64: 4, 32>}, {pipeline_mode = #tpu.pipeline_mode<synchronous>, transform_indices = @transform_4, window_bounds = array<i64: 1, 32>}, {pipeline_mode = #tpu.pipeline_mode<synchronous>, transform_indices = @transform_5, window_bounds = array<i64: 32, 32>}, {pipeline_mode = #tpu.pipeline_mode<synchronous>, transform_indices = @transform_6, window_bounds = array<i64: 1, 32>}, {pipeline_mode = #tpu.pipeline_mode<synchronous>, transform_indices = @transform_7, window_bounds = array<i64: 8, 32>}, {pipeline_mode = #tpu.pipeline_mode<synchronous>, transform_indices = @transform_8, window_bounds = array<i64: 1, 1>}, {transform_indices = @transform_9, window_bounds = array<i64: 1, 1, 8>}]} {
    %c0 = arith.constant 0 : index
    %c0_0 = arith.constant 0 : index
    %0 = vector.load %arg1[%c0, %c0_0] : memref<8x16xf32, #tpu.memory_space<vmem>>, vector<8x16xf32>
    %c0_1 = arith.constant 0 : index
    %c0_2 = arith.constant 0 : index
    %1 = vector.load %arg3[%c0_1, %c0_2] : memref<16x32xf32, #tpu.memory_space<vmem>>, vector<16x32xf32>
    %cst = arith.constant dense<0.000000e+00> : vector<8x32xf32>
    %2 = tpu.matmul %0, %1, %cst {dimension_numbers = #tpu.dot_dimension_numbers<[1], [0], [0], [1], [0, 0, 1, 1], [], []>} : vector<8x16xf32>, vector<16x32xf32>, vector<8x32xf32> -> vector<8x32xf32>
    %c0_3 = arith.constant 0 : index
    %c0_4 = arith.constant 0 : index
    %3 = vector.load %arg2[%c0_3, %c0_4] : memref<8x4xf32, #tpu.memory_space<vmem>>, vector<8x4xf32>
    %c0_5 = arith.constant 0 : index
    %c0_6 = arith.constant 0 : index
    %4 = vector.load %arg4[%c0_5, %c0_6] : memref<4x32xf32, #tpu.memory_space<vmem>>, vector<4x32xf32>
    %cst_7 = arith.constant dense<0.000000e+00> : vector<8x32xf32>
    %5 = tpu.matmul %3, %4, %cst_7 {dimension_numbers = #tpu.dot_dimension_numbers<[1], [0], [0], [1], [0, 0, 1, 1], [], []>} : vector<8x4xf32>, vector<4x32xf32>, vector<8x32xf32> -> vector<8x32xf32>
    %6 = arith.addf %2, %5 : vector<8x32xf32>
    %c0_8 = arith.constant 0 : index
    %c0_9 = arith.constant 0 : index
    %7 = vector.load %arg5[%c0_8, %c0_9] : memref<1x32xf32, #tpu.memory_space<vmem>>, vector<1x32xf32>
    %8 = vector.broadcast %7 : vector<1x32xf32> to vector<8x32xf32>
    %9 = arith.addf %6, %8 : vector<8x32xf32>
    %cst_10 = arith.constant 0.000000e+00 : f32
    %10 = vector.broadcast %cst_10 : f32 to vector<8x32xf32>
    %11 = arith.maximumf %9, %10 : vector<8x32xf32>
    %c0_11 = arith.constant 0 : index
    %c0_12 = arith.constant 0 : index
    %12 = vector.load %arg6[%c0_11, %c0_12] : memref<32x32xf32, #tpu.memory_space<vmem>>, vector<32x32xf32>
    %cst_13 = arith.constant dense<0.000000e+00> : vector<8x32xf32>
    %13 = tpu.matmul %11, %12, %cst_13 {dimension_numbers = #tpu.dot_dimension_numbers<[1], [0], [0], [1], [0, 0, 1, 1], [], []>} : vector<8x32xf32>, vector<32x32xf32>, vector<8x32xf32> -> vector<8x32xf32>
    %c0_14 = arith.constant 0 : index
    %c0_15 = arith.constant 0 : index
    %14 = vector.load %arg7[%c0_14, %c0_15] : memref<1x32xf32, #tpu.memory_space<vmem>>, vector<1x32xf32>
    %15 = vector.broadcast %14 : vector<1x32xf32> to vector<8x32xf32>
    %16 = arith.addf %13, %15 : vector<8x32xf32>
    %cst_16 = arith.constant 0.000000e+00 : f32
    %17 = vector.broadcast %cst_16 : f32 to vector<8x32xf32>
    %18 = arith.maximumf %16, %17 : vector<8x32xf32>
    %c0_17 = arith.constant 0 : index
    %c0_18 = arith.constant 0 : index
    %19 = vector.load %arg8[%c0_17, %c0_18] : memref<8x32xf32, #tpu.memory_space<vmem>>, vector<8x32xf32>
    %cst_19 = arith.constant dense<0.000000e+00> : vector<8x8xf32>
    %20 = tpu.matmul %19, %18, %cst_19 {dimension_numbers = #tpu.dot_dimension_numbers<[1], [1], [0], [0], [0, 0, 1, 0], [], []>} : vector<8x32xf32>, vector<8x32xf32>, vector<8x8xf32> -> vector<8x8xf32>
    %21 = vector.extract_strided_slice %20 {offsets = [0, 0], sizes = [1, 8], strides = [1, 1]} : vector<8x8xf32> to vector<1x8xf32>
    %c0_20 = arith.constant 0 : index
    %c0_21 = arith.constant 0 : index
    %22 = vector.load %arg9[%c0_20, %c0_21] : memref<1x1xf32, #tpu.memory_space<vmem>>, vector<1x1xf32>
    %23 = vector.broadcast %22 : vector<1x1xf32> to vector<1x8xf32>
    %24 = arith.addf %21, %23 : vector<1x8xf32>
    %25 = math.tanh %24 : vector<1x8xf32>
    %cst_22 = arith.constant 1.000000e+02 : f32
    %26 = vector.broadcast %cst_22 : f32 to vector<1x8xf32>
    %27 = arith.mulf %25, %26 : vector<1x8xf32>
    %28 = vector.shape_cast %27 : vector<1x8xf32> to vector<1x1x8xf32>
    %c0_23 = arith.constant 0 : index
    %c0_24 = arith.constant 0 : index
    %c0_25 = arith.constant 0 : index
    %29 = vector.load %arg10[%c0_23, %c0_24, %c0_25] : memref<1x1x8xf32, #tpu.memory_space<vmem>>, vector<1x1x8xf32>
    tpu.vector_store %arg10[%c0_23, %c0_24, %c0_25], %28 {strides = array<i32>} : memref<1x1x8xf32, #tpu.memory_space<vmem>>, vector<1x1x8xf32>,
    return
  }
  func.func @transform_0(%arg0: i32) -> (i32, i32) {
    %c0_i32 = arith.constant 0 : i32
    %c0_i32_0 = arith.constant 0 : i32
    return %arg0, %c0_i32 : i32, i32
  }
  func.func @transform_1(%arg0: i32) -> (i32, i32) {
    %c0_i32 = arith.constant 0 : i32
    %c0_i32_0 = arith.constant 0 : i32
    return %arg0, %c0_i32 : i32, i32
  }
  func.func @transform_2(%arg0: i32) -> (i32, i32) {
    %c0_i32 = arith.constant 0 : i32
    %c0_i32_0 = arith.constant 0 : i32
    %c0_i32_1 = arith.constant 0 : i32
    return %c0_i32, %c0_i32_0 : i32, i32
  }
  func.func @transform_3(%arg0: i32) -> (i32, i32) {
    %c0_i32 = arith.constant 0 : i32
    %c0_i32_0 = arith.constant 0 : i32
    %c0_i32_1 = arith.constant 0 : i32
    return %c0_i32, %c0_i32_0 : i32, i32
  }
  func.func @transform_4(%arg0: i32) -> (i32, i32) {
    %c0_i32 = arith.constant 0 : i32
    %c0_i32_0 = arith.constant 0 : i32
    %c0_i32_1 = arith.constant 0 : i32
    return %c0_i32, %c0_i32_0 : i32, i32
  }
  func.func @transform_5(%arg0: i32) -> (i32, i32) {
    %c0_i32 = arith.constant 0 : i32
    %c0_i32_0 = arith.constant 0 : i32
    %c0_i32_1 = arith.constant 0 : i32
    return %c0_i32, %c0_i32_0 : i32, i32
  }
  func.func @transform_6(%arg0: i32) -> (i32, i32) {
    %c0_i32 = arith.constant 0 : i32
    %c0_i32_0 = arith.constant 0 : i32
    %c0_i32_1 = arith.constant 0 : i32
    return %c0_i32, %c0_i32_0 : i32, i32
  }
  func.func @transform_7(%arg0: i32) -> (i32, i32) {
    %c0_i32 = arith.constant 0 : i32
    %c0_i32_0 = arith.constant 0 : i32
    %c0_i32_1 = arith.constant 0 : i32
    return %c0_i32, %c0_i32_0 : i32, i32
  }
  func.func @transform_8(%arg0: i32) -> (i32, i32) {
    %c0_i32 = arith.constant 0 : i32
    %c0_i32_0 = arith.constant 0 : i32
    %c0_i32_1 = arith.constant 0 : i32
    return %c0_i32, %c0_i32_0 : i32, i32
  }
  func.func @transform_9(%arg0: i32) -> (i32, i32, i32) {
    %c0_i32 = arith.constant 0 : i32
    %c0_i32_0 = arith.constant 0 : i32
    %c0_i32_1 = arith.constant 0 : i32
    return %arg0, %c0_i32, %c0_i32_0 : i32, i32, i32
  }
}

</mosaic_0001>

<llo_original>
// kernel: tpu_custom_call.1
$region0: #{tpu_custom_call.1}
  #allocation0 [shape = 'u32[]', space=smem, size = 0x4, offset = 0x4, fixed_abs, tag = 'smem constant byte address 0x4 - core index']
  #allocation1 [shape = 'u32[144,128]{1,0:T(1,128)}', space=vmem, size = 0x12000, scoped, tag = 'internal scratch']
  #allocation2 [shape = 'f32[1,1]{1,0:T(1,128)S(1)}', space=vmem, size = 0x200, scoped, tag = 'scoped memory for tpu_custom_call.1']
  %s0 = inlined_call_operand.hbm [shape: f32[8,16], index: 0, kind: input, shape index: {}]
  %s1 = inlined_call_operand.vmem [shape: f32[8,4], index: 1, kind: input, shape index: {}]
  %s2 = inlined_call_operand.hbm [shape: f32[16,32], index: 2, kind: input, shape index: {}]
  %s3 = inlined_call_operand.hbm [shape: f32[4,32], index: 3, kind: input, shape index: {}]
  %s4 = inlined_call_operand.vmem [shape: f32[1,32], index: 4, kind: input, shape index: {}]
  %s5 = inlined_call_operand.vmem [shape: f32[32,32], index: 5, kind: input, shape index: {}]
  %s6 = inlined_call_operand.vmem [shape: f32[1,32], index: 6, kind: input, shape index: {}]
  %s7 = inlined_call_operand.vmem [shape: f32[8,32], index: 7, kind: input, shape index: {}]
  %s8 = inlined_call_operand.<no memory space> [shape: f32[1,1], index: 8, kind: input, shape index: {}]
  %s9 = inlined_call_operand.hbm [shape: f32[1,1,8], index: 9, kind: output, shape index: {}]
  %s10 = sld [smem:[#allocation0]]
  $region58: #{tpu_custom_call.1} parent=0
    _
  %s12 = ssub.s32 1, %s10
  %s13 = scalar_select 0, %s12, %s10
  %v14 = vstv %s8
  %15 = vst [vmem:[#allocation2] sm:$0x1] %v14
  $region1: #{tpu_custom_call.1} parent=0
    #allocation3 [shape = 'u8[4096]{0}', space=vmem, size = 0x1000, scoped, tag = 'input window, operand 0, single buffered']
    #allocation4 [shape = 's32[1]{0}', space=sflag, size = 0x4, scoped, tag = 'scoped memory for tpu_custom_call.1']
    #allocation5 [shape = 's32[1]{0}', space=sflag, size = 0x4, scoped, tag = 'scoped memory for tpu_custom_call.1']
    #allocation6 [shape = 'u8[8192]{0}', space=vmem, size = 0x2000, scoped, tag = 'input window, operand 2, single buffered']
    #allocation7 [shape = 's32[1]{0}', space=sflag, size = 0x4, scoped, tag = 'scoped memory for tpu_custom_call.1']
    #allocation8 [shape = 'u8[2048]{0}', space=vmem, size = 0x800, scoped, tag = 'input window, operand 3, single buffered']
    #allocation9 [shape = 'u8[512]{0}', space=vmem, size = 0x400, scoped, tag = 'output window, operand 0, single buffered']
    %16 = vsyncpa [#allocation4], 0
    %17 = vsyncpa [#allocation7], 0
    %18 = vsyncpa [#allocation5], 0
    // Predicated region
    $region2: #{tpu_custom_call.1} parent=1 // pred_check
      _
    $region3: #{tpu_custom_call.1} parent=1 // pred_check_branch
      %20 = sbr.rel (0) target = $region5
    $region4: #{tpu_custom_call.1} parent=1 // pred_region
      %s22 = ssub.s32 128, 128
      %23 = vsyncadd [#allocation4], %s22
      %s25 = sshll.u32 [#allocation3], 4
      %s26 = int_to_ptr.vmem [resolvable:$true] %s25
      %28 = dma.hbm_to_vmem [thread:$0]  %s0, 128, %s26, [#allocation4]
    $region5: #{tpu_custom_call.1} parent=1 // pred_fallthru
      _
    // Predicated region
    $region6: #{tpu_custom_call.1} parent=1 // pred_check
      _
    $region7: #{tpu_custom_call.1} parent=1 // pred_check_branch
      %30 = sbr.rel (0) target = $region9
    $region8: #{tpu_custom_call.1} parent=1 // pred_region
      _
    $region9: #{tpu_custom_call.1} parent=1 // pred_fallthru
      _
    // Predicated region
    $region10: #{tpu_custom_call.1} parent=1 // pred_check
      _
    $region11: #{tpu_custom_call.1} parent=1 // pred_check_branch
      %32 = sbr.rel (0) target = $region13
    $region12: #{tpu_custom_call.1} parent=1 // pred_region
      %s34 = ssub.s32 256, 256
      %35 = vsyncadd [#allocation7], %s34
      %s36 = sshll.u32 [#allocation6], 4
      %s37 = int_to_ptr.vmem [resolvable:$true] %s36
      %42 = dma.hbm_to_vmem [thread:$0]  %s2, 256, %s37, [#allocation7], 128, 128, 8
    $region13: #{tpu_custom_call.1} parent=1 // pred_fallthru
      _
    // Predicated region
    $region14: #{tpu_custom_call.1} parent=1 // pred_check
      _
    $region15: #{tpu_custom_call.1} parent=1 // pred_check_branch
      %44 = sbr.rel (0) target = $region17
    $region16: #{tpu_custom_call.1} parent=1 // pred_region
      %s46 = ssub.s32 64, 64
      %47 = vsyncadd [#allocation7], %s46
      %s49 = sshll.u32 [#allocation8], 4
      %s50 = int_to_ptr.vmem [resolvable:$true] %s49
      %52 = dma.hbm_to_vmem [thread:$0]  %s3, 64, %s50, [#allocation7]
    $region17: #{tpu_custom_call.1} parent=1 // pred_fallthru
      _
    // Predicated region
    $region18: #{tpu_custom_call.1} parent=1 // pred_check
      _
    $region19: #{tpu_custom_call.1} parent=1 // pred_check_branch
      %54 = sbr.rel (0) target = $region21
    $region20: #{tpu_custom_call.1} parent=1 // pred_region
      _
    $region21: #{tpu_custom_call.1} parent=1 // pred_fallthru
      _
    // Predicated region
    $region22: #{tpu_custom_call.1} parent=1 // pred_check
      _
    $region23: #{tpu_custom_call.1} parent=1 // pred_check_branch
      %56 = sbr.rel (0) target = $region25
    $region24: #{tpu_custom_call.1} parent=1 // pred_region
      _
    $region25: #{tpu_custom_call.1} parent=1 // pred_fallthru
      _
    // Predicated region
    $region26: #{tpu_custom_call.1} parent=1 // pred_check
      _
    $region27: #{tpu_custom_call.1} parent=1 // pred_check_branch
      %58 = sbr.rel (0) target = $region29
    $region28: #{tpu_custom_call.1} parent=1 // pred_region
      _
    $region29: #{tpu_custom_call.1} parent=1 // pred_fallthru
      _
    // Predicated region
    $region30: #{tpu_custom_call.1} parent=1 // pred_check
      _
    $region31: #{tpu_custom_call.1} parent=1 // pred_check_branch
      %60 = sbr.rel (0) target = $region33
    $region32: #{tpu_custom_call.1} parent=1 // pred_region
      _
    $region33: #{tpu_custom_call.1} parent=1 // pred_fallthru
      _
    // Predicated region
    $region34: #{tpu_custom_call.1} parent=1 // pred_check
      _
    $region35: #{tpu_custom_call.1} parent=1 // pred_check_branch
      %62 = sbr.rel (0) target = $region37
    $region36: #{tpu_custom_call.1} parent=1 // pred_region
      _
    $region37: #{tpu_custom_call.1} parent=1 // pred_fallthru
      _
    // Predicated region
    $region38: #{tpu_custom_call.1} parent=1 // pred_check
      _
    $region39: #{tpu_custom_call.1} parent=1 // pred_check_branch
      %64 = sbr.rel (0) target = $region41
    $region40: #{tpu_custom_call.1} parent=1 // pred_region
      %65 = dma.done [#allocation4], 128
    $region41: #{tpu_custom_call.1} parent=1 // pred_fallthru
      _
    // Predicated region
    $region42: #{tpu_custom_call.1} parent=1 // pred_check
      _
    $region43: #{tpu_custom_call.1} parent=1 // pred_check_branch
      %67 = sbr.rel (0) target = $region45
    $region44: #{tpu_custom_call.1} parent=1 // pred_region
      %68 = dma.done [#allocation7], 256
    $region45: #{tpu_custom_call.1} parent=1 // pred_fallthru
      _
    // Predicated region
    $region46: #{tpu_custom_call.1} parent=1 // pred_check
      _
    $region47: #{tpu_custom_call.1} parent=1 // pred_check_branch
      %70 = sbr.rel (0) target = $region49
    $region48: #{tpu_custom_call.1} parent=1 // pred_region
      %71 = dma.done [#allocation7], 64
    $region49: #{tpu_custom_call.1} parent=1 // pred_fallthru
      _
    %v72 = vld [vmem:[#allocation3] sm:$0xff]
    %v73 = vld [vmem:[#allocation6] sm:$0xff]
    %v74 = vld [vmem:[#allocation6 + $0x8] sm:$0xff]
    %v75 = vld [vmem:[%s1] sm:$0xff]
    %v76 = vld [vmem:[#allocation8] sm:$0xf]
    %vm77 = vcmask 31744
    %v79 = vsel %vm77, %v75, 0
    %vm81 = vcmask 1043456
    %v83 = vsel %vm81, %v76, 0
    %85 = vmatprep.subr.mxu0 0.0
    %86 = vmatpush1.msra.mxu0 %v83
    %87 = vmatprep.subr.mxu0 0.0
    %88 = vmatpush1.msra.mxu0 0.0
    %89 = vmatprep.subr.mxu0 0.0
    %90 = vmatpush1.msra.mxu0 0.0
    %91 = vmatprep.subr.mxu0 0.0
    %92 = vmatpush1.msra.mxu0 0.0
    %93 = vmatprep.subr.mxu0 0.0
    %94 = vmatpush1.msra.mxu0 0.0
    %95 = vmatprep.subr.mxu0 0.0
    %96 = vmatpush1.msra.mxu0 0.0
    %97 = vmatprep.subr.mxu0 0.0
    %98 = vmatpush1.msra.mxu0 0.0
    %99 = vmatprep.subr.mxu0 0.0
    %100 = vmatpush1.msra.mxu0 0.0
    %101 = vmatprep.subr.mxu0 0.0
    %102 = vmatpush1.msra.mxu0 0.0
    %103 = vmatprep.subr.mxu0 0.0
    %104 = vmatpush1.msra.mxu0 0.0
    %105 = vmatprep.subr.mxu0 0.0
    %106 = vmatpush1.msra.mxu0 0.0
    %107 = vmatprep.subr.mxu0 0.0
    %108 = vmatpush1.msra.mxu0 0.0
    %109 = vmatprep.subr.mxu0 0.0
    %110 = vmatpush1.msra.mxu0 0.0
    %111 = vmatprep.subr.mxu0 0.0
    %112 = vmatpush1.msra.mxu0 0.0
    %113 = vmatprep.subr.mxu0 0.0
    %114 = vmatpush1.msra.mxu0 0.0
    %115 = vmatprep.subr.mxu0 0.0
    %116 = vmatpush1.msra.mxu0 0.0
    %117 = vmatprep.subr.mxu0 0.0
    %118 = vmatpush1.msra.mxu0 0.0
    %119 = vmatprep.subr.mxu0 0.0
    %120 = vmatpush1.msra.mxu0 0.0
    %121 = vmatprep.subr.mxu0 0.0
    %122 = vmatpush1.msra.mxu0 0.0
    %123 = vmatprep.subr.mxu0 0.0
    %124 = vmatpush1.msra.mxu0 0.0
    %125 = vmatprep.subr.mxu0 0.0
    %126 = vmatpush1.msra.mxu0 0.0
    %127 = vmatprep.subr.mxu0 0.0
    %128 = vmatpush1.msra.mxu0 0.0
    %129 = vmatprep.subr.mxu0 0.0
    %130 = vmatpush1.msra.mxu0 0.0
    %131 = vmatprep.subr.mxu0 0.0
    %132 = vmatpush1.msra.mxu0 0.0
    %133 = vmatprep.subr.mxu0 0.0
    %134 = vmatpush1.msra.mxu0 0.0
    %135 = vmatprep.subr.mxu0 0.0
    %136 = vmatpush1.msra.mxu0 0.0
    %137 = vmatprep.subr.mxu0 0.0
    %138 = vmatpush1.msra.mxu0 0.0
    %139 = vmatprep.subr.mxu0 0.0
    %140 = vmatpush1.msra.mxu0 0.0
    %141 = vmatprep.subr.mxu0 0.0
    %142 = vmatpush1.msra.mxu0 0.0
    %143 = vmatprep.subr.mxu0 0.0
    %144 = vmatpush1.msra.mxu0 0.0
    %145 = vmatprep.subr.mxu0 0.0
    %146 = vmatpush1.msra.mxu0 0.0
    %147 = vmatprep.subr.mxu0 0.0
    %148 = vmatpush1.msra.mxu0 0.0
    %149 = vmatprep.mubr.f32.mxu0 0.0
    %150 = vmatmul.mubr.f32.gmra.mrb[0].mxu0 %v79
    %v151 = vpop.f32.mrb[0].mxu0
    %v152 = vadd.f32 0.0, %v151
    %v153 = vpop.f32.mrb[0].mxu0
    %154 = vdwg.mxu0
    %vm155 = vcmask 130048
    %v157 = vsel %vm155, %v72, 0
    %159 = vmatprep.subr.mxu0 0.0
    %160 = vmatpush1.msra.mxu0 %v73
    %161 = vmatprep.subr.mxu0 0.0
    %162 = vmatpush1.msra.mxu0 %v74
    %163 = vmatprep.subr.mxu0 0.0
    %164 = vmatpush1.msra.mxu0 0.0
    %165 = vmatprep.subr.mxu0 0.0
    %166 = vmatpush1.msra.mxu0 0.0
    %167 = vmatprep.subr.mxu0 0.0
    %168 = vmatpush1.msra.mxu0 0.0
    %169 = vmatprep.subr.mxu0 0.0
    %170 = vmatpush1.msra.mxu0 0.0
    %171 = vmatprep.subr.mxu0 0.0
    %172 = vmatpush1.msra.mxu0 0.0
    %173 = vmatprep.subr.mxu0 0.0
    %174 = vmatpush1.msra.mxu0 0.0
    %175 = vmatprep.subr.mxu0 0.0
    %176 = vmatpush1.msra.mxu0 0.0
    %177 = vmatprep.subr.mxu0 0.0
    %178 = vmatpush1.msra.mxu0 0.0
    %179 = vmatprep.subr.mxu0 0.0
    %180 = vmatpush1.msra.mxu0 0.0
    %181 = vmatprep.subr.mxu0 0.0
    %182 = vmatpush1.msra.mxu0 0.0
    %183 = vmatprep.subr.mxu0 0.0
    %184 = vmatpush1.msra.mxu0 0.0
    %185 = vmatprep.subr.mxu0 0.0
    %186 = vmatpush1.msra.mxu0 0.0
    %187 = vmatprep.subr.mxu0 0.0
    %188 = vmatpush1.msra.mxu0 0.0
    %189 = vmatprep.subr.mxu0 0.0
    %190 = vmatpush1.msra.mxu0 0.0
    %191 = vmatprep.subr.mxu0 0.0
    %192 = vmatpush1.msra.mxu0 0.0
    %193 = vmatprep.subr.mxu0 0.0
    %194 = vmatpush1.msra.mxu0 0.0
    %195 = vmatprep.subr.mxu0 0.0
    %196 = vmatpush1.msra.mxu0 0.0
    %197 = vmatprep.subr.mxu0 0.0
    %198 = vmatpush1.msra.mxu0 0.0
    %199 = vmatprep.subr.mxu0 0.0
    %200 = vmatpush1.msra.mxu0 0.0
    %201 = vmatprep.subr.mxu0 0.0
    %202 = vmatpush1.msra.mxu0 0.0
    %203 = vmatprep.subr.mxu0 0.0
    %204 = vmatpush1.msra.mxu0 0.0
    %205 = vmatprep.subr.mxu0 0.0
    %206 = vmatpush1.msra.mxu0 0.0
    %207 = vmatprep.subr.mxu0 0.0
    %208 = vmatpush1.msra.mxu0 0.0
    %209 = vmatprep.subr.mxu0 0.0
    %210 = vmatpush1.msra.mxu0 0.0
    %211 = vmatprep.subr.mxu0 0.0
    %212 = vmatpush1.msra.mxu0 0.0
    %213 = vmatprep.subr.mxu0 0.0
    %214 = vmatpush1.msra.mxu0 0.0
    %215 = vmatprep.subr.mxu0 0.0
    %216 = vmatpush1.msra.mxu0 0.0
    %217 = vmatprep.subr.mxu0 0.0
    %218 = vmatpush1.msra.mxu0 0.0
    %219 = vmatprep.subr.mxu0 0.0
    %220 = vmatpush1.msra.mxu0 0.0
    %221 = vmatprep.subr.mxu0 0.0
    %222 = vmatpush1.msra.mxu0 0.0
    %223 = vmatprep.mubr.f32.mxu0 0.0
    %224 = vmatmul.mubr.f32.gmra.mrb[0].mxu0 %v157
    %v225 = vpop.f32.mrb[0].mxu0
    %v226 = vadd.f32 %v152, %v225
    %v227 = vpop.f32.mrb[0].mxu0
    %228 = vdwg.mxu0
    %v229 = vld [vmem:[%s4] sm:$0x1]
    %v231 = vlaneseq
    %v232 = vshrl.u32 %v231, 7
    %v233 = vsub.s32 0, %v232
    %v234 = vrot.slane %v229, %v233
    %v236 = vadd.f32 %v226, %v234
    %v237 = vmax.f32 %v236, 0.0
    %v238 = vld [vmem:[%s5] sm:$0xff]
    %v239 = vld [vmem:[%s5 + $0x8] sm:$0xff]
    %v240 = vld [vmem:[%s5 + $0x10] sm:$0xff]
    %v241 = vld [vmem:[%s5 + $0x18] sm:$0xff]
    %v242 = vld [vmem:[%s6] sm:$0x1]
    %v244 = vlaneseq
    %v245 = vshrl.u32 %v244, 7
    %v246 = vsub.s32 0, %v245
    %v247 = vrot.slane %v242, %v246
    %vm249 = vcmask 261120
    %v251 = vsel %vm249, %v237, 0
    %253 = vmatprep.subr.mxu0 0.0
    %254 = vmatpush1.msra.mxu0 %v238
    %255 = vmatprep.subr.mxu0 0.0
    %256 = vmatpush1.msra.mxu0 %v239
    %257 = vmatprep.subr.mxu0 0.0
    %258 = vmatpush1.msra.mxu0 %v240
    %259 = vmatprep.subr.mxu0 0.0
    %260 = vmatpush1.msra.mxu0 %v241
    %261 = vmatprep.subr.mxu0 0.0
    %262 = vmatpush1.msra.mxu0 0.0
    %263 = vmatprep.subr.mxu0 0.0
    %264 = vmatpush1.msra.mxu0 0.0
    %265 = vmatprep.subr.mxu0 0.0
    %266 = vmatpush1.msra.mxu0 0.0
    %267 = vmatprep.subr.mxu0 0.0
    %268 = vmatpush1.msra.mxu0 0.0
    %269 = vmatprep.subr.mxu0 0.0
    %270 = vmatpush1.msra.mxu0 0.0
    %271 = vmatprep.subr.mxu0 0.0
    %272 = vmatpush1.msra.mxu0 0.0
    %273 = vmatprep.subr.mxu0 0.0
    %274 = vmatpush1.msra.mxu0 0.0
    %275 = vmatprep.subr.mxu0 0.0
    %276 = vmatpush1.msra.mxu0 0.0
    %277 = vmatprep.subr.mxu0 0.0
    %278 = vmatpush1.msra.mxu0 0.0
    %279 = vmatprep.subr.mxu0 0.0
    %280 = vmatpush1.msra.mxu0 0.0
    %281 = vmatprep.subr.mxu0 0.0
    %282 = vmatpush1.msra.mxu0 0.0
    %283 = vmatprep.subr.mxu0 0.0
    %284 = vmatpush1.msra.mxu0 0.0
    %285 = vmatprep.subr.mxu0 0.0
    %286 = vmatpush1.msra.mxu0 0.0
    %287 = vmatprep.subr.mxu0 0.0
    %288 = vmatpush1.msra.mxu0 0.0
    %289 = vmatprep.subr.mxu0 0.0
    %290 = vmatpush1.msra.mxu0 0.0
    %291 = vmatprep.subr.mxu0 0.0
    %292 = vmatpush1.msra.mxu0 0.0
    %293 = vmatprep.subr.mxu0 0.0
    %294 = vmatpush1.msra.mxu0 0.0
    %295 = vmatprep.subr.mxu0 0.0
    %296 = vmatpush1.msra.mxu0 0.0
    %297 = vmatprep.subr.mxu0 0.0
    %298 = vmatpush1.msra.mxu0 0.0
    %299 = vmatprep.subr.mxu0 0.0
    %300 = vmatpush1.msra.mxu0 0.0
    %301 = vmatprep.subr.mxu0 0.0
    %302 = vmatpush1.msra.mxu0 0.0
    %303 = vmatprep.subr.mxu0 0.0
    %304 = vmatpush1.msra.mxu0 0.0
    %305 = vmatprep.subr.mxu0 0.0
    %306 = vmatpush1.msra.mxu0 0.0
    %307 = vmatprep.subr.mxu0 0.0
    %308 = vmatpush1.msra.mxu0 0.0
    %309 = vmatprep.subr.mxu0 0.0
    %310 = vmatpush1.msra.mxu0 0.0
    %311 = vmatprep.subr.mxu0 0.0
    %312 = vmatpush1.msra.mxu0 0.0
    %313 = vmatprep.subr.mxu0 0.0
    %314 = vmatpush1.msra.mxu0 0.0
    %315 = vmatprep.subr.mxu0 0.0
    %316 = vmatpush1.msra.mxu0 0.0
    %317 = vmatprep.mubr.f32.mxu0 0.0
    %318 = vmatmul.mubr.f32.gmra.mrb[0].mxu0 %v251
    %v319 = vpop.f32.mrb[0].mxu0
    %v320 = vadd.f32 %v247, %v319
    %v321 = vpop.f32.mrb[0].mxu0
    %322 = vdwg.mxu0
    %v323 = vmax.f32 %v320, 0.0
    %v324 = vld [vmem:[%s7] sm:$0xff]
    %v326 = vsel %vm249, %v324, 0
    %v329 = vsel %vm249, %v323, 0
    %331 = vmatprep.subr.mxu0 0.0
    %332 = vmatpush1.xpose.msra.mxu0 %v329
    %333 = vmatprep.subr.mxu0 0.0
    %334 = vmatpush1.xpose.msra.mxu0 0.0
    %335 = vmatprep.subr.mxu0 0.0
    %336 = vmatpush1.xpose.msra.mxu0 0.0
    %337 = vmatprep.subr.mxu0 0.0
    %338 = vmatpush1.xpose.msra.mxu0 0.0
    %339 = vmatprep.subr.mxu0 0.0
    %340 = vmatpush1.xpose.msra.mxu0 0.0
    %341 = vmatprep.subr.mxu0 0.0
    %342 = vmatpush1.xpose.msra.mxu0 0.0
    %343 = vmatprep.subr.mxu0 0.0
    %344 = vmatpush1.xpose.msra.mxu0 0.0
    %345 = vmatprep.subr.mxu0 0.0
    %346 = vmatpush1.xpose.msra.mxu0 0.0
    %347 = vmatprep.subr.mxu0 0.0
    %348 = vmatpush1.xpose.msra.mxu0 0.0
    %349 = vmatprep.subr.mxu0 0.0
    %350 = vmatpush1.xpose.msra.mxu0 0.0
    %351 = vmatprep.subr.mxu0 0.0
    %352 = vmatpush1.xpose.msra.mxu0 0.0
    %353 = vmatprep.subr.mxu0 0.0
    %354 = vmatpush1.xpose.msra.mxu0 0.0
    %355 = vmatprep.subr.mxu0 0.0
    %356 = vmatpush1.xpose.msra.mxu0 0.0
    %357 = vmatprep.subr.mxu0 0.0
    %358 = vmatpush1.xpose.msra.mxu0 0.0
    %359 = vmatprep.subr.mxu0 0.0
    %360 = vmatpush1.xpose.msra.mxu0 0.0
    %361 = vmatprep.subr.mxu0 0.0
    %362 = vmatpush1.xpose.msra.mxu0 0.0
    %363 = vmatprep.subr.mxu0 0.0
    %364 = vmatpush1.xpose.msra.mxu0 0.0
    %365 = vmatprep.subr.mxu0 0.0
    %366 = vmatpush1.xpose.msra.mxu0 0.0
    %367 = vmatprep.subr.mxu0 0.0
    %368 = vmatpush1.xpose.msra.mxu0 0.0
    %369 = vmatprep.subr.mxu0 0.0
    %370 = vmatpush1.xpose.msra.mxu0 0.0
    %371 = vmatprep.subr.mxu0 0.0
    %372 = vmatpush1.xpose.msra.mxu0 0.0
    %373 = vmatprep.subr.mxu0 0.0
    %374 = vmatpush1.xpose.msra.mxu0 0.0
    %375 = vmatprep.subr.mxu0 0.0
    %376 = vmatpush1.xpose.msra.mxu0 0.0
    %377 = vmatprep.subr.mxu0 0.0
    %378 = vmatpush1.xpose.msra.mxu0 0.0
    %379 = vmatprep.subr.mxu0 0.0
    %380 = vmatpush1.xpose.msra.mxu0 0.0
    %381 = vmatprep.subr.mxu0 0.0
    %382 = vmatpush1.xpose.msra.mxu0 0.0
    %383 = vmatprep.subr.mxu0 0.0
    %384 = vmatpush1.xpose.msra.mxu0 0.0
    %385 = vmatprep.subr.mxu0 0.0
    %386 = vmatpush1.xpose.msra.mxu0 0.0
    %387 = vmatprep.subr.mxu0 0.0
    %388 = vmatpush1.xpose.msra.mxu0 0.0
    %389 = vmatprep.subr.mxu0 0.0
    %390 = vmatpush1.xpose.msra.mxu0 0.0
    %391 = vmatprep.subr.mxu0 0.0
    %392 = vmatpush1.xpose.msra.mxu0 0.0
    %393 = vmatprep.subr.mxu0 0.0
    %394 = vmatpush1.xpose.msra.mxu0 0.0
    %395 = vmatprep.mubr.f32.mxu0 0.0
    %396 = vmatmul.mubr.f32.gmra.mrb[0].mxu0 %v326
    %v397 = vpop.f32.mrb[0].mxu0
    %v398 = vadd.f32 0.0, %v397
    %v399 = vpop.f32.mrb[0].mxu0
    %400 = vdwg.mxu0
    %v401 = vld [vmem:[#allocation2] sm:$0x1]
    %403 = vset.pattern.permute.xlu0 0
    %404 = vperm.xlu0 %403, %v401
    %v405 = vpop.permute.xlu0 %404
    %v407 = vlaneseq
    %v408 = vshrl.u32 %v407, 7
    %v409 = vsub.s32 0, %v408
    %v410 = vrot.slane %v405, %v409
    %v411 = vadd.f32 %v398, %v410
    %v412 = vtanh.pop %v411
    %v413 = vmul.f32 %v412, 100.0
    %vm414 = vcmask 57344
    %415 = vst.msk [vmem:[#allocation9] sm:$0x1] %vm414, %v413
    // Predicated region
    $region50: #{tpu_custom_call.1} parent=1 // pred_check
      _
    $region51: #{tpu_custom_call.1} parent=1 // pred_check_branch
      %417 = sbr.rel (0) target = $region53
    $region52: #{tpu_custom_call.1} parent=1 // pred_region
      %s419 = ssub.s32 16, 16
      %420 = vsyncadd [#allocation5], %s419
      %s422 = sshll.u32 [#allocation9], 4
      %s423 = int_to_ptr.vmem [resolvable:$true] %s422
      %425 = dma.vmem_to_hbm [thread:$0]  %s423, 16, %s9, [#allocation5]
    $region53: #{tpu_custom_call.1} parent=1 // pred_fallthru
      _
    // Predicated region
    $region54: #{tpu_custom_call.1} parent=1 // pred_check
      _
    $region55: #{tpu_custom_call.1} parent=1 // pred_check_branch
      %427 = sbr.rel (0) target = $region57
    $region56: #{tpu_custom_call.1} parent=1 // pred_region
      %428 = dma.done [#allocation5], 16
    $region57: #{tpu_custom_call.1} parent=1 // pred_fallthru
      _
    %429 = vsyncpa [#allocation4], 1
    %430 = vsyncpa [#allocation7], 1
    %431 = vsyncpa [#allocation5], 1

</llo_original>
